<compile_context>
chip_gen: v7x
topology: tpu7x:2x2x1
jax: 0.10.0
libtpu: 0.0.40
codegen_flags: <defaults>
</compile_context>

<pallas_src>
import functools

import jax
import jax.numpy as jnp
from jax.experimental import pallas as pl
from jax.experimental.pallas import tpu as pltpu

EPS = 1e-5  # nn.LayerNorm default


def _round_up(x, m):
    return ((x + m - 1) // m) * m


def _vmem_capacity_bytes():
    try:
        return int(pltpu.get_tpu_info().vmem_capacity_bytes)
    except Exception:
        return 64 << 20  # conservative fallback: v7x per-TensorCore VMEM


def _working_set_bytes(tm, tn, d_in, x_itemsize, out_itemsize):
    return (2 * tm * d_in * x_itemsize       # double-buffered x tile
            + 2 * d_in * tn * 2              # double-buffered bf16 W slab
            + 2 * tm * tn * out_itemsize     # double-buffered output tile
            + tm * d_in * 2                  # bf16 normalized-x scratch
            + 4 * (2 * d_in + tn))           # gamma / beta / bias broadcasts


def _linear_layer_kernel(x_ref, gamma_ref, beta_ref, w_ref, b_ref, o_ref, xn_ref):
    # LayerNorm: computed once per row tile (first j step), cached as bf16.
    @pl.when(pl.program_id(1) == 0)
    def _():
        x = x_ref[...].astype(jnp.float32)                        # (TM, D_in)
        inv_d = 1.0 / x.shape[-1]
        mean = jnp.sum(x, axis=-1, keepdims=True) * inv_d
        ex2 = jnp.sum(x * x, axis=-1, keepdims=True) * inv_d
        var = ex2 - mean * mean                                    # single-pass variance
        xn = (x - mean) * jax.lax.rsqrt(var + EPS)
        xn = xn * gamma_ref[...].astype(jnp.float32) + beta_ref[...].astype(jnp.float32)
        xn_ref[...] = xn.astype(jnp.bfloat16)

    # Dropout: eval-mode identity (see TODO at top of file).

    # Linear on the MXU: bf16 operands, f32 accumulation; bias + ReLU fused.
    y = jnp.dot(xn_ref[...], w_ref[...], preferred_element_type=jnp.float32)
    y = y + b_ref[...].astype(jnp.float32)
    o_ref[...] = jnp.maximum(y, 0.0).astype(o_ref.dtype)           # (TM, TN)


@functools.partial(jax.jit, static_argnames=("tm", "tn"))
def linear_layer_forward(x, gamma, beta, w, b, *, tm=512, tn=256):
    """x: (N, L, D_in) -> (N, L, D_out). gamma/beta: (D_in,), w: (D_in, D_out), b: (D_out,)."""
    N, L, D_in = x.shape
    D_out = w.shape[1]
    rows = N * L

    x_it = jnp.dtype(x.dtype).itemsize
    out_dtype = x.dtype
    out_it = jnp.dtype(out_dtype).itemsize

    # Lane-dense output tile (multiple of 128), never wider than padded D_out.
    tn_eff = min(tn, _round_up(D_out, 128))

    # Row tile: multiple of 8, shrunk until the working set fits ~70% of VMEM.
    budget = int(0.70 * _vmem_capacity_bytes())
    tm_eff = min(_round_up(tm, 8), _round_up(rows, 8))
    while tm_eff > 8 and _working_set_bytes(tm_eff, tn_eff, D_in, x_it, out_it) > budget:
        tm_eff = max(8, _round_up(tm_eff // 2, 8))
    working_set = _working_set_bytes(tm_eff, tn_eff, D_in, x_it, out_it)
    vmem_limit = int(min(max(int(1.25 * working_set), 32 << 20), budget))

    grid_i = pl.cdiv(rows, tm_eff)        # row tiles (outer / slow axis)
    dout_p = _round_up(D_out, tn_eff)
    grid_j = dout_p // tn_eff             # output-lane tiles (inner / fast axis)

    # Activations: no padding (partial last row tile is masked by Pallas).
    x2 = x.reshape(rows, D_in)

    # Parameters: pad D_out to a lane multiple (cheap, done once), pre-cast W to bf16.
    w_bf16 = w.astype(jnp.bfloat16)
    if dout_p != D_out:
        w_bf16 = jnp.pad(w_bf16, ((0, 0), (0, dout_p - D_out)))
        b_p = jnp.pad(b, ((0, dout_p - D_out),))
    else:
        b_p = b

    gamma2 = gamma.reshape(1, D_in)
    beta2 = beta.reshape(1, D_in)
    b2 = b_p.reshape(1, dout_p)

    out2 = pl.pallas_call(
        _linear_layer_kernel,
        out_shape=jax.ShapeDtypeStruct((rows, dout_p), out_dtype),
        grid_spec=pltpu.PrefetchScalarGridSpec(
            num_scalar_prefetch=0,
            grid=(grid_i, grid_j),   # j fastest -> x tile + cached LN stay resident
            in_specs=[
                pl.BlockSpec((tm_eff, D_in), lambda i, j: (i, 0)),    # x tile
                pl.BlockSpec((1, D_in), lambda i, j: (0, 0)),         # gamma
                pl.BlockSpec((1, D_in), lambda i, j: (0, 0)),         # beta
                pl.BlockSpec((D_in, tn_eff), lambda i, j: (0, j)),    # bf16 W slab
                pl.BlockSpec((1, tn_eff), lambda i, j: (0, j)),       # bias
            ],
            out_specs=pl.BlockSpec((tm_eff, tn_eff), lambda i, j: (i, j)),
            scratch_shapes=[pltpu.VMEM((tm_eff, D_in), jnp.bfloat16)],  # cached LN(x)
        ),
        compiler_params=pltpu.CompilerParams(
            dimension_semantics=("parallel", "arbitrary"),
            vmem_limit_bytes=vmem_limit,
        ),
        cost_estimate=pl.CostEstimate(
            flops=2 * rows * D_in * dout_p + 8 * rows * D_in,
            transcendentals=rows,
            bytes_accessed=rows * D_in * x_it + D_in * dout_p * 2
            + rows * dout_p * out_it,
        ),
    )(x2, gamma2, beta2, w_bf16, b2)

    return out2[:, :D_out].reshape(N, L, D_out)


if __name__ == "__main__":
    N, L, D_in, D_out = 2, 8, 32, 16

    key = jax.random.PRNGKey(0)
    kx, kw, kb = jax.random.split(key, 3)

    x = jax.random.normal(kx, (N, L, D_in), dtype=jnp.float32)

    # Deterministic parameter init (synthetic, not a checkpoint load).
    gamma = jnp.ones((D_in,), dtype=jnp.float32)
    beta = jnp.zeros((D_in,), dtype=jnp.float32)
    # Equivalent to torch Linear (out, in) weight, stored transposed as (in, out).
    bound = 1.0 / (D_in ** 0.5)
    w = jax.random.uniform(kw, (D_in, D_out), minval=-bound, maxval=bound,
                           dtype=jnp.float32)
    b = jax.random.uniform(kb, (D_out,), minval=-bound, maxval=bound,
                           dtype=jnp.float32)

    out = linear_layer_forward(x, gamma, beta, w, b)
    jax.block_until_ready(out)

    # Reference check in plain JAX (f32). The kernel's GEMM runs with bf16
    # operands (f32 accumulation), so tolerances are loosened accordingly.
    mean = jnp.mean(x, axis=-1, keepdims=True)
    var = jnp.mean(jnp.square(x - mean), axis=-1, keepdims=True)
    xn = (x - mean) / jnp.sqrt(var + EPS) * gamma + beta
    ref = jnp.maximum(jnp.einsum("nld,de->nle", xn, w) + b, 0.0)
    assert out.shape == ref.shape, "shape mismatch vs reference"
    assert jnp.allclose(out, ref, atol=5e-2, rtol=5e-2), "mismatch vs reference"

    print("KERNEL_OK")
</pallas_src>

<mosaic_0001>
module attributes {stable_mosaic.version = 11 : i64} {
  func.func @_linear_layer_kernel(%arg0: i32, %arg1: i32, %arg2: memref<16x32xf32, #tpu.memory_space<vmem>>, %arg3: memref<1x32xf32, #tpu.memory_space<vmem>>, %arg4: memref<1x32xf32, #tpu.memory_space<vmem>>, %arg5: memref<32x128xbf16, #tpu.memory_space<vmem>>, %arg6: memref<1x128xf32, #tpu.memory_space<vmem>>, %arg7: memref<16x128xf32, #tpu.memory_space<vmem>>, %arg8: memref<16x32xbf16, #tpu.memory_space<vmem>>) attributes {dimension_semantics = [#tpu.dimension_semantics<parallel>, #tpu.dimension_semantics<arbitrary>], iteration_bounds = array<i64: 1, 1>, scalar_prefetch = 0 : i64, scratch_operands = 1 : i64, tpu.core_type = #tpu.core_type<tc>, window_params = [{transform_indices = @transform_0, window_bounds = array<i64: 16, 32>}, {pipeline_mode = #tpu.pipeline_mode<synchronous>, transform_indices = @transform_1, window_bounds = array<i64: 1, 32>}, {pipeline_mode = #tpu.pipeline_mode<synchronous>, transform_indices = @transform_2, window_bounds = array<i64: 1, 32>}, {transform_indices = @transform_3, window_bounds = array<i64: 32, 128>}, {transform_indices = @transform_4, window_bounds = array<i64: 1, 128>}, {transform_indices = @transform_5, window_bounds = array<i64: 16, 128>}]} {
    %c0_i32 = arith.constant 0 : i32
    %0 = arith.cmpi eq, %arg1, %c0_i32 : i32
    %1 = arith.extui %0 : i1 to i32
    %c0_i32_0 = arith.constant 0 : i32
    %2 = arith.cmpi ne, %1, %c0_i32_0 : i32
    scf.if %2 {
      %c0_9 = arith.constant 0 : index
      %c0_10 = arith.constant 0 : index
      %12 = vector.load %arg2[%c0_9, %c0_10] : memref<16x32xf32, #tpu.memory_space<vmem>>, vector<16x32xf32>
      %cst_11 = arith.constant dense<0.000000e+00> : vector<16xf32>
      %13 = vector.multi_reduction <add>, %12, %cst_11 [1] : vector<16x32xf32> to vector<16xf32>
      %14 = vector.shape_cast %13 : vector<16xf32> to vector<16x1xf32>
      %cst_12 = arith.constant 3.125000e-02 : f32
      %15 = vector.broadcast %cst_12 : f32 to vector<16x1xf32>
      %16 = arith.mulf %14, %15 : vector<16x1xf32>
      %17 = arith.mulf %12, %12 : vector<16x32xf32>
      %cst_13 = arith.constant dense<0.000000e+00> : vector<16xf32>
      %18 = vector.multi_reduction <add>, %17, %cst_13 [1] : vector<16x32xf32> to vector<16xf32>
      %19 = vector.shape_cast %18 : vector<16xf32> to vector<16x1xf32>
      %cst_14 = arith.constant 3.125000e-02 : f32
      %20 = vector.broadcast %cst_14 : f32 to vector<16x1xf32>
      %21 = arith.mulf %19, %20 : vector<16x1xf32>
      %22 = arith.mulf %16, %16 : vector<16x1xf32>
      %23 = arith.subf %21, %22 : vector<16x1xf32>
      %24 = vector.broadcast %16 : vector<16x1xf32> to vector<16x32xf32>
      %25 = arith.subf %12, %24 : vector<16x32xf32>
      %cst_15 = arith.constant 9.99999974E-6 : f32
      %26 = vector.broadcast %cst_15 : f32 to vector<16x1xf32>
      %27 = arith.addf %23, %26 : vector<16x1xf32>
      %28 = math.rsqrt %27 : vector<16x1xf32>
      %29 = vector.broadcast %28 : vector<16x1xf32> to vector<16x32xf32>
      %30 = arith.mulf %25, %29 : vector<16x32xf32>
      %c0_16 = arith.constant 0 : index
      %c0_17 = arith.constant 0 : index
      %31 = vector.load %arg3[%c0_16, %c0_17] : memref<1x32xf32, #tpu.memory_space<vmem>>, vector<1x32xf32>
      %32 = vector.broadcast %31 : vector<1x32xf32> to vector<16x32xf32>
      %33 = arith.mulf %30, %32 : vector<16x32xf32>
      %c0_18 = arith.constant 0 : index
      %c0_19 = arith.constant 0 : index
      %34 = vector.load %arg4[%c0_18, %c0_19] : memref<1x32xf32, #tpu.memory_space<vmem>>, vector<1x32xf32>
      %35 = vector.broadcast %34 : vector<1x32xf32> to vector<16x32xf32>
      %36 = arith.addf %33, %35 : vector<16x32xf32>
      %37 = arith.truncf %36 : vector<16x32xf32> to vector<16x32xbf16>
      %c0_20 = arith.constant 0 : index
      %c0_21 = arith.constant 0 : index
      %38 = vector.load %arg8[%c0_20, %c0_21] : memref<16x32xbf16, #tpu.memory_space<vmem>>, vector<16x32xbf16>
      tpu.vector_store %arg8[%c0_20, %c0_21], %37 {strides = array<i32>} : memref<16x32xbf16, #tpu.memory_space<vmem>>, vector<16x32xbf16>,
    } else {
    }
    %c0 = arith.constant 0 : index
    %c0_1 = arith.constant 0 : index
    %3 = vector.load %arg8[%c0, %c0_1] : memref<16x32xbf16, #tpu.memory_space<vmem>>, vector<16x32xbf16>
    %c0_2 = arith.constant 0 : index
    %c0_3 = arith.constant 0 : index
    %4 = vector.load %arg5[%c0_2, %c0_3] : memref<32x128xbf16, #tpu.memory_space<vmem>>, vector<32x128xbf16>
    %cst = arith.constant dense<0.000000e+00> : vector<16x128xf32>
    %5 = tpu.matmul %3, %4, %cst {dimension_numbers = #tpu.dot_dimension_numbers<[1], [0], [0], [1], [0, 0, 1, 1], [], []>} : vector<16x32xbf16>, vector<32x128xbf16>, vector<16x128xf32> -> vector<16x128xf32>
    %c0_4 = arith.constant 0 : index
    %c0_5 = arith.constant 0 : index
    %6 = vector.load %arg6[%c0_4, %c0_5] : memref<1x128xf32, #tpu.memory_space<vmem>>, vector<1x128xf32>
    %7 = vector.broadcast %6 : vector<1x128xf32> to vector<16x128xf32>
    %8 = arith.addf %5, %7 : vector<16x128xf32>
    %cst_6 = arith.constant 0.000000e+00 : f32
    %9 = vector.broadcast %cst_6 : f32 to vector<16x128xf32>
    %10 = arith.maximumf %8, %9 : vector<16x128xf32>
    %c0_7 = arith.constant 0 : index
    %c0_8 = arith.constant 0 : index
    %11 = vector.load %arg7[%c0_7, %c0_8] : memref<16x128xf32, #tpu.memory_space<vmem>>, vector<16x128xf32>
    tpu.vector_store %arg7[%c0_7, %c0_8], %10 {strides = array<i32>} : memref<16x128xf32, #tpu.memory_space<vmem>>, vector<16x128xf32>,
    return
  }
  func.func @transform_0(%arg0: i32, %arg1: i32) -> (i32, i32) {
    %c0_i32 = arith.constant 0 : i32
    %c0_i32_0 = arith.constant 0 : i32
    return %arg0, %c0_i32 : i32, i32
  }
  func.func @transform_1(%arg0: i32, %arg1: i32) -> (i32, i32) {
    %c0_i32 = arith.constant 0 : i32
    %c0_i32_0 = arith.constant 0 : i32
    %c0_i32_1 = arith.constant 0 : i32
    return %c0_i32, %c0_i32_0 : i32, i32
  }
  func.func @transform_2(%arg0: i32, %arg1: i32) -> (i32, i32) {
    %c0_i32 = arith.constant 0 : i32
    %c0_i32_0 = arith.constant 0 : i32
    %c0_i32_1 = arith.constant 0 : i32
    return %c0_i32, %c0_i32_0 : i32, i32
  }
  func.func @transform_3(%arg0: i32, %arg1: i32) -> (i32, i32) {
    %c0_i32 = arith.constant 0 : i32
    %c0_i32_0 = arith.constant 0 : i32
    return %c0_i32, %arg1 : i32, i32
  }
  func.func @transform_4(%arg0: i32, %arg1: i32) -> (i32, i32) {
    %c0_i32 = arith.constant 0 : i32
    %c0_i32_0 = arith.constant 0 : i32
    return %c0_i32, %arg1 : i32, i32
  }
  func.func @transform_5(%arg0: i32, %arg1: i32) -> (i32, i32) {
    %c0_i32 = arith.constant 0 : i32
    return %arg0, %arg1 : i32, i32
  }
}

</mosaic_0001>

<llo_original>
// kernel: linear_layer_forward.1
$region0: #{linear_layer_forward.1}
  #allocation0 [shape = 'u32[]', space=smem, size = 0x4, offset = 0x4, fixed_abs, tag = 'smem constant byte address 0x4 - core index']
  #allocation1 [shape = 'u32[144,128]{1,0:T(1,128)}', space=vmem, size = 0x12000, scoped, tag = 'internal scratch']
  #allocation2 [shape = 'bf16[16,32]{1,0:T(16,128)(2,1)}', space=vmem, size = 0x1000, scoped, tag = 'scratch operand']
  %s0 = inlined_call_operand.vmem [shape: f32[16,32], index: 0, kind: input, shape index: {}]
  %s1 = inlined_call_operand.vmem [shape: f32[1,32], index: 1, kind: input, shape index: {}]
  %s2 = inlined_call_operand.vmem [shape: f32[1,32], index: 2, kind: input, shape index: {}]
  %s3 = inlined_call_operand.vmem [shape: bf16[32,128], index: 3, kind: input, shape index: {}]
  %s4 = inlined_call_operand.vmem [shape: f32[1,128], index: 4, kind: input, shape index: {}]
  %s5 = inlined_call_operand.vmem [shape: f32[16,128], index: 5, kind: output, shape index: {}]
  %s6 = sld [smem:[#allocation0]]
  $region34: #{linear_layer_forward.1} parent=0
    _
  %s8 = ssub.s32 1, %s6
  %s9 = scalar_select 0, %s8, %s6
  // Predicated region
  $region2: #{linear_layer_forward.1} parent=0 // pred_check
    _
  $region3: #{linear_layer_forward.1} parent=0 // pred_check_branch
    %11 = sbr.rel (0) target = $region5
  $region4: #{linear_layer_forward.1} parent=0 // pred_region
    _
  $region5: #{linear_layer_forward.1} parent=0 // pred_fallthru
    _
  // Predicated region
  $region6: #{linear_layer_forward.1} parent=0 // pred_check
    _
  $region7: #{linear_layer_forward.1} parent=0 // pred_check_branch
    %13 = sbr.rel (0) target = $region9
  $region8: #{linear_layer_forward.1} parent=0 // pred_region
    _
  $region9: #{linear_layer_forward.1} parent=0 // pred_fallthru
    _
  // Predicated region
  $region10: #{linear_layer_forward.1} parent=0 // pred_check
    _
  $region11: #{linear_layer_forward.1} parent=0 // pred_check_branch
    %15 = sbr.rel (0) target = $region13
  $region12: #{linear_layer_forward.1} parent=0 // pred_region
    _
  $region13: #{linear_layer_forward.1} parent=0 // pred_fallthru
    _
  // Predicated region
  $region14: #{linear_layer_forward.1} parent=0 // pred_check
    _
  $region15: #{linear_layer_forward.1} parent=0 // pred_check_branch
    %17 = sbr.rel (0) target = $region17
  $region16: #{linear_layer_forward.1} parent=0 // pred_region
    _
  $region17: #{linear_layer_forward.1} parent=0 // pred_fallthru
    _
  // Predicated region
  $region18: #{linear_layer_forward.1} parent=0 // pred_check
    _
  $region19: #{linear_layer_forward.1} parent=0 // pred_check_branch
    %19 = sbr.rel (0) target = $region21
  $region20: #{linear_layer_forward.1} parent=0 // pred_region
    _
  $region21: #{linear_layer_forward.1} parent=0 // pred_fallthru
    _
  %p21 = scmp.eq.s32.totalorder 0, 0
  // Predicated region
  $region22: #{linear_layer_forward.1} parent=0 // pred_check
    %p22 = pneg %p21
  $region23: #{linear_layer_forward.1} parent=0 // pred_check_branch
    %24 = sbr.rel (%p22) target = $region25
  $region24: #{linear_layer_forward.1} parent=0 // pred_region
    %v25 = vld [vmem:[%s0] sm:$0xff]
    %v26 = vld [vmem:[%s0 + $0x8] sm:$0xff]
    %vm27 = vcmask 261120
    %v28 = vsel %vm27, %v25, 0.0
    %29 = vadd.xlane.f32.xlu0 %v28
    %v30 = vpop.xlane.xlu0 %29
    %v31 = vsel %vm27, %v26, 0.0
    %32 = vadd.xlane.f32.xlu0 %v31
    %v33 = vpop.xlane.xlu0 %32
    %v34 = vmul.f32 %v30, 0.03125
    %v35 = vmul.f32 %v33, 0.03125
    %v36 = vmul.f32 %v25, %v25
    %v37 = vmul.f32 %v26, %v26
    %v38 = vsel %vm27, %v36, 0.0
    %39 = vadd.xlane.f32.xlu0 %v38
    %v40 = vpop.xlane.xlu0 %39
    %v41 = vsel %vm27, %v37, 0.0
    %42 = vadd.xlane.f32.xlu0 %v41
    %v43 = vpop.xlane.xlu0 %42
    %v44 = vmul.f32 %v40, 0.03125
    %v45 = vmul.f32 %v43, 0.03125
    %v46 = vmul.f32 %v34, %v34
    %v47 = vmul.f32 %v35, %v35
    %v48 = vsub.f32 %v44, %v46
    %v49 = vsub.f32 %v45, %v47
    %v50 = vsub.f32 %v25, %v34
    %v51 = vsub.f32 %v26, %v35
    %v52 = vadd.f32 %v48, 1e-05
    %v53 = vadd.f32 %v49, 1e-05
    %v54 = vrsqrt.pop %v52
    %v55 = vrsqrt.pop %v53
    %v56 = vmul.f32 %v50, %v54
    %v57 = vmul.f32 %v51, %v55
    %v58 = vld [vmem:[%s1] sm:$0x1]
    %v60 = vlaneseq
    %v61 = vshrl.u32 %v60, 7
    %v62 = vsub.s32 0, %v61
    %v63 = vrot.slane %v58, %v62
    %v65 = vmul.f32 %v56, %v63
    %v66 = vmul.f32 %v57, %v63
    %v67 = vld [vmem:[%s2] sm:$0x1]
    %v69 = vlaneseq
    %v70 = vshrl.u32 %v69, 7
    %v71 = vsub.s32 0, %v70
    %v72 = vrot.slane %v67, %v71
    %v74 = vadd.f32 %v65, %v72
    %v75 = vadd.f32 %v66, %v72
    %v76 = vpack.c.bf16 %v75, %v74
    %77 = vst.msk [vmem:[#allocation2] sm:$0xff] %vm27, %v76
  $region25: #{linear_layer_forward.1} parent=0 // pred_fallthru
    _
  %v78 = vld [vmem:[#allocation2] sm:$0xff]
  %v79 = vld [vmem:[%s3] sm:$0xf]
  %v80 = vld [vmem:[%s3 + $0x4] sm:$0xf]
  %v81 = vld [vmem:[%s3 + $0x8] sm:$0xf]
  %v82 = vld [vmem:[%s3 + $0xc] sm:$0xf]
  %v83 = vld [vmem:[%s4] sm:$0x1]
  %v85 = vlaneseq
  %v86 = vshrl.u32 %v85, 7
  %v87 = vsub.s32 0, %v86
  %v88 = vrot.slane %v83, %v87
  %v94 = vunpack.c.l.b16 %v79
  %v95 = vunpack.c.l.b16 %v80
  %v96 = vunpack.c.l.b16 %v81
  %v97 = vunpack.c.l.b16 %v82
  %v98 = vpack.c.b16 %v95, %v94
  %v99 = vpack.c.b16 %v97, %v96
  %vm102 = vcmask 261120
  %v104 = vsel %vm102, %v78, 0
  %106 = vmatprep.subr.bf16.mxu0 0
  %107 = vmatpush1.bf16.msra.mxu0 %v98
  %108 = vmatprep.subr.bf16.mxu0 0
  %109 = vmatpush1.bf16.msra.mxu0 %v99
  %110 = vmatprep.subr.bf16.mxu0 0
  %111 = vmatpush1.bf16.msra.mxu0 0
  %112 = vmatprep.subr.bf16.mxu0 0
  %113 = vmatpush1.bf16.msra.mxu0 0
  %114 = vmatprep.subr.bf16.mxu0 0
  %115 = vmatpush1.bf16.msra.mxu0 0
  %116 = vmatprep.subr.bf16.mxu0 0
  %117 = vmatpush1.bf16.msra.mxu0 0
  %118 = vmatprep.subr.bf16.mxu0 0
  %119 = vmatpush1.bf16.msra.mxu0 0
  %120 = vmatprep.subr.bf16.mxu0 0
  %121 = vmatpush1.bf16.msra.mxu0 0
  %122 = vmatprep.subr.bf16.mxu0 0
  %123 = vmatpush1.bf16.msra.mxu0 0
  %124 = vmatprep.subr.bf16.mxu0 0
  %125 = vmatpush1.bf16.msra.mxu0 0
  %126 = vmatprep.subr.bf16.mxu0 0
  %127 = vmatpush1.bf16.msra.mxu0 0
  %128 = vmatprep.subr.bf16.mxu0 0
  %129 = vmatpush1.bf16.msra.mxu0 0
  %130 = vmatprep.subr.bf16.mxu0 0
  %131 = vmatpush1.bf16.msra.mxu0 0
  %132 = vmatprep.subr.bf16.mxu0 0
  %133 = vmatpush1.bf16.msra.mxu0 0
  %134 = vmatprep.subr.bf16.mxu0 0
  %135 = vmatpush1.bf16.msra.mxu0 0
  %136 = vmatprep.subr.bf16.mxu0 0
  %137 = vmatpush1.bf16.msra.mxu0 0
  %138 = vmatprep.mubr.bf16.mxu0 0
  %139 = vmatmul.mubr.bf16.gmra.mrb[0].mxu0 %v104
  %v140 = vpop.f32.mrb[0].mxu0
  %v141 = vadd.f32 %v88, %v140
  %v142 = vpop.f32.mrb[0].mxu0
  %v143 = vpop.f32.mrb[0].mxu0
  %v144 = vadd.f32 %v88, %v143
  %v145 = vpop.f32.mrb[0].mxu0
  %146 = vdwg.mxu0
  %v147 = vmax.f32 %v141, 0.0
  %v148 = vmax.f32 %v144, 0.0
  %149 = vst [vmem:[%s5] sm:$0xff] %v147
  %150 = vst [vmem:[%s5 + $0x8] sm:$0xff] %v148
  // Predicated region
  $region26: #{linear_layer_forward.1} parent=0 // pred_check
    _
  $region27: #{linear_layer_forward.1} parent=0 // pred_check_branch
    %152 = sbr.rel (0) target = $region29
  $region28: #{linear_layer_forward.1} parent=0 // pred_region
    _
  $region29: #{linear_layer_forward.1} parent=0 // pred_fallthru
    _
  // Predicated region
  $region30: #{linear_layer_forward.1} parent=0 // pred_check
    _
  $region31: #{linear_layer_forward.1} parent=0 // pred_check_branch
    %154 = sbr.rel (0) target = $region33
  $region32: #{linear_layer_forward.1} parent=0 // pred_region
    _
  $region33: #{linear_layer_forward.1} parent=0 // pred_fallthru
    _

</llo_original>
